<compile_context>
chip_gen: v6e
topology: v6e:2x2x1
jax: 0.10.0
libtpu: 0.0.40
codegen_flags: <defaults>
</compile_context>

<pallas_src>
import functools

import jax
import jax.numpy as jnp
import numpy as np
from jax.experimental import pallas as pl
from jax.experimental.pallas import tpu as pltpu


# ------------------------------- kernel --------------------------------------

def _clft_kernel(*refs, tau, num_pairs, with_hard):
    """CLFTPos forward in a single launch.

    refs (train): emb(B,D) VMEM, w(B,B) VMEM, s(B,B) VMEM, p(B,B) VMEM,
                  lam(1,) SMEM, out(1,) SMEM
    refs (eval) : emb(B,D) VMEM, w(B,B) VMEM, out(1,) SMEM
    """
    if with_hard:
        emb_ref, w_ref, s_ref, p_ref, lam_ref, out_ref = refs
    else:
        emb_ref, w_ref, out_ref = refs

    B = w_ref.shape[0]
    inv_sqrt_tau = float(tau) ** -0.5
    inv_denom = 0.5 / float(num_pairs)

    w = w_ref[...]
    rows = jax.lax.broadcasted_iota(jnp.int32, (B, B), 0)
    cols = jax.lax.broadcasted_iota(jnp.int32, (B, B), 1)
    # True at "negative" entries: off-diagonal and not a positive pair.
    keep = jnp.logical_and(rows != cols, w == 0.0)

    def slab_loss(e):
        # L2 normalization with eps clamp; fold 1/tau into the per-row scale.
        # TODO(synk): torch cosine_similarity clamps ||a||*||b|| >= eps; we
        # clamp each norm independently (identical for non-degenerate rows).
        sumsq = jnp.sum(e * e, axis=1, keepdims=True)
        scale = jax.lax.rsqrt(jnp.maximum(sumsq, 1e-16)) * inv_sqrt_tau
        en = e * scale

        # cos/tau: contract over D of both operands -> no explicit transpose.
        cos_s = jax.lax.dot_general(
            en, en, (((1,), (1,)), ((), ())),
            preferred_element_type=jnp.float32)

        expc = jnp.exp(cos_s)
        # Row-sum of masked negatives (diagonal + positive pairs zeroed).
        neg = jnp.sum(jnp.where(keep, expc, 0.0), axis=1, keepdims=True)

        # -log(expc[i,j]/(expc[i,j]+neg[i])) == log(expc + neg) - cos/tau.
        term = jnp.log(expc + neg) - cos_s

        # W hits both (i,j) and (j,i) of every pair, so the weighted sum is
        # sum_p (loss_ij + loss_ji); normalize by 2 * num_pairs.
        return jnp.sum(w * term) * inv_denom

    emb = emb_ref[...]
    loss = slab_loss(emb)

    if with_hard:
        # hard_pos_embeddings = (lam*S + (1-lam)*P) @ E, built in-kernel.
        lam = lam_ref[0]
        mix = lam * s_ref[...] + (1.0 - lam) * p_ref[...]
        hard = jax.lax.dot_general(
            mix, emb, (((1,), (0,)), ((), ())),
            preferred_element_type=jnp.float32)
        loss = (loss + slab_loss(hard)) * 0.5

    out_ref[0] = loss


# ------------------------ static host-side structures -------------------------

@functools.lru_cache(maxsize=64)
def _pair_matrix(batch_size, pairs):
    w = np.zeros((batch_size, batch_size), dtype=np.float32)
    for i, j in pairs:
        w[i, j] = 1.0
        w[j, i] = 1.0
    return jnp.asarray(w)


@functools.lru_cache(maxsize=64)
def _selector_matrices(batch_size, pairs):
    """Static selectors so hard = (lam*S + (1-lam)*P) @ E reproduces the torch
    extrapolate_positive_pairs loop, including 'last write wins' ordering."""
    s = np.zeros((batch_size, batch_size), dtype=np.float32)
    p = np.zeros((batch_size, batch_size), dtype=np.float32)
    for i, j in pairs:
        s[i, :] = 0.0; p[i, :] = 0.0
        s[j, :] = 0.0; p[j, :] = 0.0
        s[i, i] = 1.0; p[i, j] = 1.0
        s[j, j] = 1.0; p[j, i] = 1.0
    return jnp.asarray(s), jnp.asarray(p)


# --------------------------------- wrappers -----------------------------------

_VMEM = pl.BlockSpec(memory_space=pltpu.MemorySpace.VMEM)
_SMEM = pl.BlockSpec(memory_space=pltpu.MemorySpace.SMEM)


def _clft_pallas(embeddings, positive_pairs, tau, lam=None):
    num_pairs = len(positive_pairs)
    if num_pairs == 0:
        raise ValueError("positive_pairs must be non-empty")
    emb = jnp.asarray(embeddings, jnp.float32)
    B = emb.shape[0]
    pairs_key = tuple((int(i), int(j)) for i, j in positive_pairs)
    w = _pair_matrix(B, pairs_key)

    with_hard = lam is not None
    kernel = functools.partial(_clft_kernel, tau=float(tau),
                               num_pairs=num_pairs, with_hard=with_hard)
    if with_hard:
        s, p = _selector_matrices(B, pairs_key)
        lam_arr = jnp.asarray(lam, jnp.float32).reshape(1)
        out = pl.pallas_call(
            kernel,
            out_shape=jax.ShapeDtypeStruct((1,), jnp.float32),
            in_specs=[_VMEM, _VMEM, _VMEM, _VMEM, _SMEM],
            out_specs=_SMEM,
        )(emb, w, s, p, lam_arr)
    else:
        out = pl.pallas_call(
            kernel,
            out_shape=jax.ShapeDtypeStruct((1,), jnp.float32),
            in_specs=[_VMEM, _VMEM],
            out_specs=_SMEM,
        )(emb, w)
    return out[0]


def contrastive_loss_with_labels_pallas(embeddings, positive_pairs, tau=0.08):
    return _clft_pallas(embeddings, positive_pairs, tau, lam=None)


def clft_pos_forward(embeddings, positive_pairs, stage, *, key=None,
                     beta=0.08, gamma=2.0):
    """Pallas-backed CLFTPos.forward."""
    embeddings = jnp.asarray(embeddings, jnp.float32)
    if stage in ("train", "sanity_check"):
        # TODO(synk): lambda sampled with jax.random.beta instead of
        # torch.distributions.Beta (same distribution, different RNG stream).
        lam = jax.random.beta(key, gamma, gamma) + 1.0
        return _clft_pallas(embeddings, positive_pairs, beta, lam=lam)
    return _clft_pallas(embeddings, positive_pairs, beta, lam=None)


# ----------------------------- pure-JAX reference -----------------------------

def _scl_reference(embeddings, positive_pairs, tau=0.08):
    e = jnp.asarray(embeddings, jnp.float32)
    norms = jnp.maximum(jnp.linalg.norm(e, axis=1, keepdims=True), 1e-8)
    en = e / norms
    cos = en @ en.T
    b = e.shape[0]
    mask = np.eye(b, dtype=bool)
    for i, j in positive_pairs:
        mask[i, j] = True
        mask[j, i] = True
    expc = jnp.exp(cos / tau)
    expc_m = jnp.where(jnp.asarray(mask), 0.0, expc)
    loss = 0.0
    for i, j in positive_pairs:
        pos_ij = expc[i, j]
        pos_ji = expc[j, i]
        neg_i = jnp.sum(expc_m[i])
        neg_j = jnp.sum(expc_m[j])
        loss += -jnp.log(pos_ij / (pos_ij + neg_i))
        loss += -jnp.log(pos_ji / (pos_ji + neg_j))
    return loss / (2 * len(positive_pairs))


def _extrapolate_positive_pairs_ref(embeddings, positive_pairs, lam):
    # Matches extrapolate_positive_pairs(dim_mixing=False, normalize=False),
    # including "last write wins" ordering if an index appears in many pairs.
    hard = jnp.zeros_like(embeddings)
    for i, j in positive_pairs:
        new_i = lam * embeddings[i] + (1.0 - lam) * embeddings[j]
        new_j = lam * embeddings[j] + (1.0 - lam) * embeddings[i]
        hard = hard.at[i].set(new_i)
        hard = hard.at[j].set(new_j)
    return hard


def _clft_pos_reference(embeddings, positive_pairs, stage, *, key=None,
                        beta=0.08, gamma=2.0):
    emb = jnp.asarray(embeddings, jnp.float32)
    loss_o = _scl_reference(emb, positive_pairs, beta)
    if stage in ("train", "sanity_check"):
        lam = jax.random.beta(key, gamma, gamma) + 1.0
        hard = _extrapolate_positive_pairs_ref(emb, positive_pairs, lam)
        loss_h = _scl_reference(hard, positive_pairs, beta)
        return (loss_o + loss_h) * 0.5
    return loss_o


if __name__ == "__main__":
    key = jax.random.PRNGKey(0)
    k_emb, k_lam = jax.random.split(key)
    batch, dim = 8, 32
    embeddings = jax.random.normal(k_emb, (batch, dim), dtype=jnp.float32)
    positive_pairs = [(0, 1), (2, 3), (4, 5), (6, 7)]
    beta, gamma = 0.08, 2.0

    # train stage: original + hard-positive losses fused into one pallas_call
    loss_train = jax.block_until_ready(
        clft_pos_forward(embeddings, positive_pairs, "train", key=k_lam,
                         beta=beta, gamma=gamma))
    ref_train = jax.block_until_ready(
        _clft_pos_reference(embeddings, positive_pairs, "train", key=k_lam,
                            beta=beta, gamma=gamma))
    assert np.allclose(np.asarray(loss_train), np.asarray(ref_train),
                       rtol=1e-4, atol=1e-4), (float(loss_train), float(ref_train))

    # eval stage: single slab
    loss_val = jax.block_until_ready(
        clft_pos_forward(embeddings, positive_pairs, "val",
                         beta=beta, gamma=gamma))
    ref_val = jax.block_until_ready(
        _scl_reference(embeddings, positive_pairs, beta))
    assert np.allclose(np.asarray(loss_val), np.asarray(ref_val),
                       rtol=1e-4, atol=1e-4), (float(loss_val), float(ref_val))

    print("KERNEL_OK")
</pallas_src>

<mosaic_0001>
module attributes {stable_mosaic.version = 11 : i64} {
  func.func @_clft_kernel(%arg0: memref<8x32xf32, #tpu.memory_space<vmem>>, %arg1: memref<8x8xf32, #tpu.memory_space<vmem>>, %arg2: memref<8x8xf32, #tpu.memory_space<vmem>>, %arg3: memref<8x8xf32, #tpu.memory_space<vmem>>, %arg4: memref<1xf32, #tpu.memory_space<smem>>, %arg5: memref<1xf32, #tpu.memory_space<smem>>) attributes {dimension_semantics = [], scalar_prefetch = 0 : i64, scratch_operands = 0 : i64, tpu.core_type = #tpu.core_type<tc>} {
    %c0 = arith.constant 0 : index
    %c0_0 = arith.constant 0 : index
    %0 = vector.load %arg1[%c0, %c0_0] : memref<8x8xf32, #tpu.memory_space<vmem>>, vector<8x8xf32>
    %1 = tpu.iota {dimensions = array<i32: 0>} : vector<8x8xi32>
    %2 = tpu.iota {dimensions = array<i32: 1>} : vector<8x8xi32>
    %3 = arith.cmpi ne, %1, %2 : vector<8x8xi32>
    %cst = arith.constant 0.000000e+00 : f32
    %4 = vector.broadcast %cst : f32 to vector<8x8xf32>
    %5 = arith.cmpf oeq, %0, %4 : vector<8x8xf32>
    %6 = arith.andi %3, %5 : vector<8x8xi1>
    %c0_1 = arith.constant 0 : index
    %c0_2 = arith.constant 0 : index
    %7 = vector.load %arg0[%c0_1, %c0_2] : memref<8x32xf32, #tpu.memory_space<vmem>>, vector<8x32xf32>
    %8 = arith.mulf %7, %7 : vector<8x32xf32>
    %cst_3 = arith.constant dense<0.000000e+00> : vector<8xf32>
    %9 = vector.multi_reduction <add>, %8, %cst_3 [1] : vector<8x32xf32> to vector<8xf32>
    %10 = vector.shape_cast %9 : vector<8xf32> to vector<8x1xf32>
    %cst_4 = arith.constant 1.000000e-16 : f32
    %11 = vector.broadcast %cst_4 : f32 to vector<8x1xf32>
    %12 = arith.maximumf %10, %11 : vector<8x1xf32>
    %13 = math.rsqrt %12 : vector<8x1xf32>
    %cst_5 = arith.constant 3.53553391 : f32
    %14 = vector.broadcast %cst_5 : f32 to vector<8x1xf32>
    %15 = arith.mulf %13, %14 : vector<8x1xf32>
    %16 = vector.broadcast %15 : vector<8x1xf32> to vector<8x32xf32>
    %17 = arith.mulf %7, %16 : vector<8x32xf32>
    %cst_6 = arith.constant dense<0.000000e+00> : vector<8x8xf32>
    %18 = tpu.matmul %17, %17, %cst_6 {dimension_numbers = #tpu.dot_dimension_numbers<[1], [1], [0], [0], [0, 0, 1, 0], [], []>} : vector<8x32xf32>, vector<8x32xf32>, vector<8x8xf32> -> vector<8x8xf32>
    %19 = math.exp %18 : vector<8x8xf32>
    %cst_7 = arith.constant 0.000000e+00 : f32
    %20 = vector.broadcast %cst_7 : f32 to vector<8x8xf32>
    %21 = arith.select %6, %19, %20 : vector<8x8xi1>, vector<8x8xf32>
    %cst_8 = arith.constant dense<0.000000e+00> : vector<8xf32>
    %22 = vector.multi_reduction <add>, %21, %cst_8 [1] : vector<8x8xf32> to vector<8xf32>
    %23 = vector.shape_cast %22 : vector<8xf32> to vector<8x1xf32>
    %24 = vector.broadcast %23 : vector<8x1xf32> to vector<8x8xf32>
    %25 = arith.addf %19, %24 : vector<8x8xf32>
    %26 = math.log %25 : vector<8x8xf32>
    %27 = arith.subf %26, %18 : vector<8x8xf32>
    %28 = arith.mulf %0, %27 : vector<8x8xf32>
    %29 = vector.shape_cast %28 : vector<8x8xf32> to vector<1x8x8xf32>
    %cst_9 = arith.constant dense<0.000000e+00> : vector<1xf32>
    %30 = vector.multi_reduction <add>, %29, %cst_9 [1, 2] : vector<1x8x8xf32> to vector<1xf32>
    %31 = vector.shape_cast %30 : vector<1xf32> to vector<1x1x1xf32>
    %32 = vector.extract %31[0, 0, 0] : f32 from vector<1x1x1xf32>
    %cst_10 = arith.constant 1.250000e-01 : f32
    %33 = arith.mulf %32, %cst_10 : f32
    %c0_11 = arith.constant 0 : index
    %34 = memref.load %arg4[%c0_11] : memref<1xf32, #tpu.memory_space<smem>>
    %c0_12 = arith.constant 0 : index
    %c0_13 = arith.constant 0 : index
    %35 = vector.load %arg2[%c0_12, %c0_13] : memref<8x8xf32, #tpu.memory_space<vmem>>, vector<8x8xf32>
    %36 = vector.broadcast %34 : f32 to vector<8x8xf32>
    %37 = arith.mulf %36, %35 : vector<8x8xf32>
    %cst_14 = arith.constant 1.000000e+00 : f32
    %38 = arith.subf %cst_14, %34 : f32
    %c0_15 = arith.constant 0 : index
    %c0_16 = arith.constant 0 : index
    %39 = vector.load %arg3[%c0_15, %c0_16] : memref<8x8xf32, #tpu.memory_space<vmem>>, vector<8x8xf32>
    %40 = vector.broadcast %38 : f32 to vector<8x8xf32>
    %41 = arith.mulf %40, %39 : vector<8x8xf32>
    %42 = arith.addf %37, %41 : vector<8x8xf32>
    %cst_17 = arith.constant dense<0.000000e+00> : vector<8x32xf32>
    %43 = tpu.matmul %42, %7, %cst_17 {dimension_numbers = #tpu.dot_dimension_numbers<[1], [0], [0], [1], [0, 0, 1, 1], [], []>} : vector<8x8xf32>, vector<8x32xf32>, vector<8x32xf32> -> vector<8x32xf32>
    %44 = arith.mulf %43, %43 : vector<8x32xf32>
    %cst_18 = arith.constant dense<0.000000e+00> : vector<8xf32>
    %45 = vector.multi_reduction <add>, %44, %cst_18 [1] : vector<8x32xf32> to vector<8xf32>
    %46 = vector.shape_cast %45 : vector<8xf32> to vector<8x1xf32>
    %cst_19 = arith.constant 1.000000e-16 : f32
    %47 = vector.broadcast %cst_19 : f32 to vector<8x1xf32>
    %48 = arith.maximumf %46, %47 : vector<8x1xf32>
    %49 = math.rsqrt %48 : vector<8x1xf32>
    %cst_20 = arith.constant 3.53553391 : f32
    %50 = vector.broadcast %cst_20 : f32 to vector<8x1xf32>
    %51 = arith.mulf %49, %50 : vector<8x1xf32>
    %52 = vector.broadcast %51 : vector<8x1xf32> to vector<8x32xf32>
    %53 = arith.mulf %43, %52 : vector<8x32xf32>
    %cst_21 = arith.constant dense<0.000000e+00> : vector<8x8xf32>
    %54 = tpu.matmul %53, %53, %cst_21 {dimension_numbers = #tpu.dot_dimension_numbers<[1], [1], [0], [0], [0, 0, 1, 0], [], []>} : vector<8x32xf32>, vector<8x32xf32>, vector<8x8xf32> -> vector<8x8xf32>
    %55 = math.exp %54 : vector<8x8xf32>
    %cst_22 = arith.constant 0.000000e+00 : f32
    %56 = vector.broadcast %cst_22 : f32 to vector<8x8xf32>
    %57 = arith.select %6, %55, %56 : vector<8x8xi1>, vector<8x8xf32>
    %cst_23 = arith.constant dense<0.000000e+00> : vector<8xf32>
    %58 = vector.multi_reduction <add>, %57, %cst_23 [1] : vector<8x8xf32> to vector<8xf32>
    %59 = vector.shape_cast %58 : vector<8xf32> to vector<8x1xf32>
    %60 = vector.broadcast %59 : vector<8x1xf32> to vector<8x8xf32>
    %61 = arith.addf %55, %60 : vector<8x8xf32>
    %62 = math.log %61 : vector<8x8xf32>
    %63 = arith.subf %62, %54 : vector<8x8xf32>
    %64 = arith.mulf %0, %63 : vector<8x8xf32>
    %65 = vector.shape_cast %64 : vector<8x8xf32> to vector<1x8x8xf32>
    %cst_24 = arith.constant dense<0.000000e+00> : vector<1xf32>
    %66 = vector.multi_reduction <add>, %65, %cst_24 [1, 2] : vector<1x8x8xf32> to vector<1xf32>
    %67 = vector.shape_cast %66 : vector<1xf32> to vector<1x1x1xf32>
    %68 = vector.extract %67[0, 0, 0] : f32 from vector<1x1x1xf32>
    %cst_25 = arith.constant 1.250000e-01 : f32
    %69 = arith.mulf %68, %cst_25 : f32
    %70 = arith.addf %33, %69 : f32
    %cst_26 = arith.constant 5.000000e-01 : f32
    %71 = arith.mulf %70, %cst_26 : f32
    %c0_27 = arith.constant 0 : index
    %72 = memref.load %arg5[%c0_27] : memref<1xf32, #tpu.memory_space<smem>>
    memref.store %71, %arg5[%c0_27] : memref<1xf32, #tpu.memory_space<smem>>
    return
  }
}

</mosaic_0001>

<llo_original>
// kernel: tpu_custom_call.1
$region0: #{tpu_custom_call.1}
  #allocation0 [shape = 'u32[]', space=smem, size = 0x4, offset = 0x4, fixed_abs, tag = 'smem constant byte address 0x4 - core index']
  #allocation1 [shape = 'u32[144,128]{1,0:T(1,128)}', space=vmem, size = 0x12000, scoped, tag = 'internal scratch']
  #allocation2 [shape = 'f32[1]{0:T(128)S(6)}', space=smem, size = 0x200, scoped, tag = 'scoped memory for tpu_custom_call.1']
  %s0 = inlined_call_operand.hbm [shape: f32[8,32], index: 0, kind: input, shape index: {}]
  %s1 = inlined_call_operand.hbm [shape: f32[8,8], index: 1, kind: input, shape index: {}]
  %s2 = inlined_call_operand.hbm [shape: f32[8,8], index: 2, kind: input, shape index: {}]
  %s3 = inlined_call_operand.hbm [shape: f32[8,8], index: 3, kind: input, shape index: {}]
  %s4 = inlined_call_operand.<no memory space> [shape: f32[1], index: 4, kind: input, shape index: {}]
  %s5 = inlined_call_operand.hbm [shape: f32[1], index: 5, kind: output, shape index: {}]
  %s6 = sld [smem:[#allocation0]]
  $region46: #{tpu_custom_call.1} parent=0
    _
  %s8 = ssub.s32 1, %s6
  %s9 = scalar_select 0, %s8, %s6
  %10 = sst [smem:[#allocation2]] %s4
  $region1: #{tpu_custom_call.1} parent=0
    #allocation3 [shape = 'u8[4096]{0}', space=vmem, size = 0x1000, scoped, tag = 'input window, operand 0, single buffered']
    #allocation4 [shape = 's32[1]{0}', space=sflag, size = 0x4, scoped, tag = 'scoped memory for tpu_custom_call.1']
    #allocation5 [shape = 's32[1]{0}', space=sflag, size = 0x4, scoped, tag = 'scoped memory for tpu_custom_call.1']
    #allocation6 [shape = 'u8[4096]{0}', space=vmem, size = 0x1000, scoped, tag = 'input window, operand 1, single buffered']
    #allocation7 [shape = 's32[1]{0}', space=sflag, size = 0x4, scoped, tag = 'scoped memory for tpu_custom_call.1']
    #allocation8 [shape = 'u8[4096]{0}', space=vmem, size = 0x1000, scoped, tag = 'input window, operand 2, single buffered']
    #allocation9 [shape = 'u8[4096]{0}', space=vmem, size = 0x1000, scoped, tag = 'input window, operand 3, single buffered']
    #allocation10 [shape = 's32[1]{0}', space=sflag, size = 0x4, scoped, tag = 'scoped memory for tpu_custom_call.1']
    #allocation11 [shape = 'u8[512]{0}', space=smem, size = 0x200, scoped, tag = 'output window, operand 0, single buffered']
    %11 = vsyncpa [#allocation4], 0
    %12 = vsyncpa [#allocation7], 0
    %13 = vsyncpa [#allocation10], 0
    %14 = vsyncpa [#allocation5], 0
    // Predicated region
    $region2: #{tpu_custom_call.1} parent=1 // pred_check
      _
    $region3: #{tpu_custom_call.1} parent=1 // pred_check_branch
      %16 = sbr.rel (0) target = $region5
    $region4: #{tpu_custom_call.1} parent=1 // pred_region
      %s18 = ssub.s32 128, 128
      %19 = vsyncadd [#allocation4], %s18
      %s21 = sshll.u32 [#allocation3], 4
      %s22 = int_to_ptr.vmem [resolvable:$true] %s21
      %24 = dma.hbm_to_vmem [thread:$0]  %s0, 128, %s22, [#allocation4]
    $region5: #{tpu_custom_call.1} parent=1 // pred_fallthru
      _
    // Predicated region
    $region6: #{tpu_custom_call.1} parent=1 // pred_check
      _
    $region7: #{tpu_custom_call.1} parent=1 // pred_check_branch
      %26 = sbr.rel (0) target = $region9
    $region8: #{tpu_custom_call.1} parent=1 // pred_region
      %s28 = ssub.s32 128, 128
      %29 = vsyncadd [#allocation7], %s28
      %s31 = sshll.u32 [#allocation6], 4
      %s32 = int_to_ptr.vmem [resolvable:$true] %s31
      %34 = dma.hbm_to_vmem [thread:$0]  %s1, 128, %s32, [#allocation7]
    $region9: #{tpu_custom_call.1} parent=1 // pred_fallthru
      _
    // Predicated region
    $region10: #{tpu_custom_call.1} parent=1 // pred_check
      _
    $region11: #{tpu_custom_call.1} parent=1 // pred_check_branch
      %36 = sbr.rel (0) target = $region13
    $region12: #{tpu_custom_call.1} parent=1 // pred_region
      %s38 = ssub.s32 128, 128
      %39 = vsyncadd [#allocation7], %s38
      %s41 = sshll.u32 [#allocation8], 4
      %s42 = int_to_ptr.vmem [resolvable:$true] %s41
      %44 = dma.hbm_to_vmem [thread:$0]  %s2, 128, %s42, [#allocation7]
    $region13: #{tpu_custom_call.1} parent=1 // pred_fallthru
      _
    // Predicated region
    $region14: #{tpu_custom_call.1} parent=1 // pred_check
      _
    $region15: #{tpu_custom_call.1} parent=1 // pred_check_branch
      %46 = sbr.rel (0) target = $region17
    $region16: #{tpu_custom_call.1} parent=1 // pred_region
      %s48 = ssub.s32 128, 128
      %49 = vsyncadd [#allocation10], %s48
      %s51 = sshll.u32 [#allocation9], 4
      %s52 = int_to_ptr.vmem [resolvable:$true] %s51
      %54 = dma.hbm_to_vmem [thread:$0]  %s3, 128, %s52, [#allocation10]
    $region17: #{tpu_custom_call.1} parent=1 // pred_fallthru
      _
    // Predicated region
    $region18: #{tpu_custom_call.1} parent=1 // pred_check
      _
    $region19: #{tpu_custom_call.1} parent=1 // pred_check_branch
      %56 = sbr.rel (0) target = $region21
    $region20: #{tpu_custom_call.1} parent=1 // pred_region
      _
    $region21: #{tpu_custom_call.1} parent=1 // pred_fallthru
      _
    // Predicated region
    $region22: #{tpu_custom_call.1} parent=1 // pred_check
      _
    $region23: #{tpu_custom_call.1} parent=1 // pred_check_branch
      %58 = sbr.rel (0) target = $region25
    $region24: #{tpu_custom_call.1} parent=1 // pred_region
      %59 = dma.done [#allocation4], 128
    $region25: #{tpu_custom_call.1} parent=1 // pred_fallthru
      _
    // Predicated region
    $region26: #{tpu_custom_call.1} parent=1 // pred_check
      _
    $region27: #{tpu_custom_call.1} parent=1 // pred_check_branch
      %61 = sbr.rel (0) target = $region29
    $region28: #{tpu_custom_call.1} parent=1 // pred_region
      %62 = dma.done [#allocation7], 128
    $region29: #{tpu_custom_call.1} parent=1 // pred_fallthru
      _
    // Predicated region
    $region30: #{tpu_custom_call.1} parent=1 // pred_check
      _
    $region31: #{tpu_custom_call.1} parent=1 // pred_check_branch
      %64 = sbr.rel (0) target = $region33
    $region32: #{tpu_custom_call.1} parent=1 // pred_region
      %65 = dma.done [#allocation7], 128
    $region33: #{tpu_custom_call.1} parent=1 // pred_fallthru
      _
    // Predicated region
    $region34: #{tpu_custom_call.1} parent=1 // pred_check
      _
    $region35: #{tpu_custom_call.1} parent=1 // pred_check_branch
      %67 = sbr.rel (0) target = $region37
    $region36: #{tpu_custom_call.1} parent=1 // pred_region
      %68 = dma.done [#allocation10], 128
    $region37: #{tpu_custom_call.1} parent=1 // pred_fallthru
      _
    %v69 = vld [vmem:[#allocation6] sm:$0xff]
    %v70 = vlaneseq
    %v71 = vshrl.u32 %v70, 7
    %v72 = vlaneseq
    %v73 = vand.u32 %v72, 127
    %vm74 = vcmp.ne.s32.totalorder %v71, %v73
    %vm75 = vcmp.eq.f32.partialorder %v69, 0.0
    %vm76 = vmand %vm74, %vm75
    %v77 = vld [vmem:[#allocation3] sm:$0xff]
    %v78 = vmul.f32 %v77, %v77
    %vm79 = vcmask 261120
    %v80 = vsel %vm79, %v78, 0.0
    %81 = vadd.xlane.f32.xlu0 %v80
    %v82 = vpop.xlane.xlu0 %81
    %v83 = vmax.f32 %v82, 1e-16
    %v84 = vrsqrt.pop %v83
    %v85 = vmul.f32 %v84, 3.535534
    %v86 = vmul.f32 %v77, %v85
    %v88 = vsel %vm79, %v86, 0
    %90 = vmatprep.subr.mxu0 0.0
    %91 = vmatpush1.xpose.msra.mxu0 0.0
    %92 = vmatprep.subr.mxu0 0.0
    %93 = vmatpush1.xpose.msra.mxu0 0.0
    %94 = vmatprep.subr.mxu0 0.0
    %95 = vmatpush1.xpose.msra.mxu0 0.0
    %96 = vmatprep.subr.mxu0 0.0
    %97 = vmatpush1.xpose.msra.mxu0 0.0
    %98 = vmatprep.subr.mxu0 0.0
    %99 = vmatpush1.xpose.msra.mxu0 0.0
    %100 = vmatprep.subr.mxu0 0.0
    %101 = vmatpush1.xpose.msra.mxu0 0.0
    %102 = vmatprep.subr.mxu0 0.0
    %103 = vmatpush1.xpose.msra.mxu0 0.0
    %104 = vmatprep.subr.mxu0 0.0
    %105 = vmatpush1.xpose.msra.mxu0 0.0
    %106 = vmatprep.subr.mxu0 0.0
    %107 = vmatpush1.xpose.msra.mxu0 0.0
    %108 = vmatprep.subr.mxu0 0.0
    %109 = vmatpush1.xpose.msra.mxu0 0.0
    %110 = vmatprep.subr.mxu0 0.0
    %111 = vmatpush1.xpose.msra.mxu0 0.0
    %112 = vmatprep.subr.mxu0 0.0
    %113 = vmatpush1.xpose.msra.mxu0 0.0
    %114 = vmatprep.subr.mxu0 0.0
    %115 = vmatpush1.xpose.msra.mxu0 0.0
    %116 = vmatprep.subr.mxu0 0.0
    %117 = vmatpush1.xpose.msra.mxu0 0.0
    %118 = vmatprep.subr.mxu0 0.0
    %119 = vmatpush1.xpose.msra.mxu0 0.0
    %120 = vmatprep.subr.mxu0 0.0
    %121 = vmatpush1.xpose.msra.mxu0 %v88
    %122 = vmatprep.subr.mxu0 0.0
    %123 = vmatpush2.xpose.msra.mxu0 0.0
    %124 = vmatprep.subr.mxu0 0.0
    %125 = vmatpush2.xpose.msra.mxu0 0.0
    %126 = vmatprep.subr.mxu0 0.0
    %127 = vmatpush2.xpose.msra.mxu0 0.0
    %128 = vmatprep.subr.mxu0 0.0
    %129 = vmatpush2.xpose.msra.mxu0 0.0
    %130 = vmatprep.subr.mxu0 0.0
    %131 = vmatpush2.xpose.msra.mxu0 0.0
    %132 = vmatprep.subr.mxu0 0.0
    %133 = vmatpush2.xpose.msra.mxu0 0.0
    %134 = vmatprep.subr.mxu0 0.0
    %135 = vmatpush2.xpose.msra.mxu0 0.0
    %136 = vmatprep.subr.mxu0 0.0
    %137 = vmatpush2.xpose.msra.mxu0 0.0
    %138 = vmatprep.subr.mxu0 0.0
    %139 = vmatpush2.xpose.msra.mxu0 0.0
    %140 = vmatprep.subr.mxu0 0.0
    %141 = vmatpush2.xpose.msra.mxu0 0.0
    %142 = vmatprep.subr.mxu0 0.0
    %143 = vmatpush2.xpose.msra.mxu0 0.0
    %144 = vmatprep.subr.mxu0 0.0
    %145 = vmatpush2.xpose.msra.mxu0 0.0
    %146 = vmatprep.subr.mxu0 0.0
    %147 = vmatpush2.xpose.msra.mxu0 0.0
    %148 = vmatprep.subr.mxu0 0.0
    %149 = vmatpush2.xpose.msra.mxu0 0.0
    %150 = vmatprep.subr.mxu0 0.0
    %151 = vmatpush2.xpose.msra.mxu0 0.0
    %152 = vmatprep.subr.mxu0 0.0
    %153 = vmatpush2.xpose.msra.mxu0 0.0
    %154 = vmatprep.mubr.f32.mxu0 0.0
    %155 = vmatmul.mubr.f32.gmra.mxu0 %v88
    %v156 = vpop.f32.mrf.mxu0
    %v157 = vadd.f32 0.0, %v156
    %v158 = vpop.f32.mrf.mxu0
    %159 = vdwg.mxu0
    %v160 = vmul.f32 %v157, 1.442695
    %v161 = vpow.pop %v160
    %v162 = vsel %vm76, %v161, 0.0
    %vm163 = vcmask 64512
    %v164 = vsel %vm163, %v162, 0.0
    %165 = vadd.xlane.f32.xlu0 %v164
    %v166 = vpop.xlane.xlu0 %165
    %v167 = vadd.f32 %v161, %v166
    %v168 = vlog2.pop %v167
    %v169 = vmul.f32 %v168, 0.6931472
    %v170 = vsub.f32 %v169, %v157
    %v171 = vmul.f32 %v69, %v170
    %v172 = vsel %vm163, %v171, 0.0
    %173 = vadd.xlane.f32.xlu0 %v172
    %v174 = vpop.xlane.xlu0 %173
    %v175 = vrot.slane %v174, 4
    %v176 = vadd.f32 %v174, %v175
    %v177 = vrot.slane %v176, 2
    %v178 = vadd.f32 %v176, %v177
    %v179 = vrot.slane %v178, 1
    %v180 = vadd.f32 %v178, %v179
    %s181 = vtos %v180
    %s182 = smul.f32 %s181, 0.125
    %s183 = sld [smem:[#allocation2]]
    %v184 = vld [vmem:[#allocation8] sm:$0xff]
    %v185 = vstv %s183
    %v186 = vmul.f32 %v185, %v184
    %s187 = ssub.f32 1.0, %s183
    %v188 = vld [vmem:[#allocation9] sm:$0xff]
    %v189 = vstv %s187
    %v190 = vmul.f32 %v189, %v188
    %v191 = vadd.f32 %v186, %v190
    %v193 = vsel %vm163, %v191, 0
    %195 = vmatprep.subr.mxu0 0.0
    %196 = vmatpush1.msra.mxu0 0.0
    %197 = vmatprep.subr.mxu0 0.0
    %198 = vmatpush1.msra.mxu0 0.0
    %199 = vmatprep.subr.mxu0 0.0
    %200 = vmatpush1.msra.mxu0 0.0
    %201 = vmatprep.subr.mxu0 0.0
    %202 = vmatpush1.msra.mxu0 0.0
    %203 = vmatprep.subr.mxu0 0.0
    %204 = vmatpush1.msra.mxu0 0.0
    %205 = vmatprep.subr.mxu0 0.0
    %206 = vmatpush1.msra.mxu0 0.0
    %207 = vmatprep.subr.mxu0 0.0
    %208 = vmatpush1.msra.mxu0 0.0
    %209 = vmatprep.subr.mxu0 0.0
    %210 = vmatpush1.msra.mxu0 0.0
    %211 = vmatprep.subr.mxu0 0.0
    %212 = vmatpush1.msra.mxu0 0.0
    %213 = vmatprep.subr.mxu0 0.0
    %214 = vmatpush1.msra.mxu0 0.0
    %215 = vmatprep.subr.mxu0 0.0
    %216 = vmatpush1.msra.mxu0 0.0
    %217 = vmatprep.subr.mxu0 0.0
    %218 = vmatpush1.msra.mxu0 0.0
    %219 = vmatprep.subr.mxu0 0.0
    %220 = vmatpush1.msra.mxu0 0.0
    %221 = vmatprep.subr.mxu0 0.0
    %222 = vmatpush1.msra.mxu0 0.0
    %223 = vmatprep.subr.mxu0 0.0
    %224 = vmatpush1.msra.mxu0 0.0
    %225 = vmatprep.subr.mxu0 0.0
    %226 = vmatpush1.msra.mxu0 %v77
    %227 = vmatprep.subr.mxu0 0.0
    %228 = vmatpush2.msra.mxu0 0.0
    %229 = vmatprep.subr.mxu0 0.0
    %230 = vmatpush2.msra.mxu0 0.0
    %231 = vmatprep.subr.mxu0 0.0
    %232 = vmatpush2.msra.mxu0 0.0
    %233 = vmatprep.subr.mxu0 0.0
    %234 = vmatpush2.msra.mxu0 0.0
    %235 = vmatprep.subr.mxu0 0.0
    %236 = vmatpush2.msra.mxu0 0.0
    %237 = vmatprep.subr.mxu0 0.0
    %238 = vmatpush2.msra.mxu0 0.0
    %239 = vmatprep.subr.mxu0 0.0
    %240 = vmatpush2.msra.mxu0 0.0
    %241 = vmatprep.subr.mxu0 0.0
    %242 = vmatpush2.msra.mxu0 0.0
    %243 = vmatprep.subr.mxu0 0.0
    %244 = vmatpush2.msra.mxu0 0.0
    %245 = vmatprep.subr.mxu0 0.0
    %246 = vmatpush2.msra.mxu0 0.0
    %247 = vmatprep.subr.mxu0 0.0
    %248 = vmatpush2.msra.mxu0 0.0
    %249 = vmatprep.subr.mxu0 0.0
    %250 = vmatpush2.msra.mxu0 0.0
    %251 = vmatprep.subr.mxu0 0.0
    %252 = vmatpush2.msra.mxu0 0.0
    %253 = vmatprep.subr.mxu0 0.0
    %254 = vmatpush2.msra.mxu0 0.0
    %255 = vmatprep.subr.mxu0 0.0
    %256 = vmatpush2.msra.mxu0 0.0
    %257 = vmatprep.subr.mxu0 0.0
    %258 = vmatpush2.msra.mxu0 0.0
    %259 = vmatprep.mubr.f32.mxu0 0.0
    %260 = vmatmul.mubr.f32.gmra.mxu0 %v193
    %v261 = vpop.f32.mrf.mxu0
    %v262 = vadd.f32 0.0, %v261
    %v263 = vpop.f32.mrf.mxu0
    %264 = vdwg.mxu0
    %v265 = vmul.f32 %v262, %v262
    %v266 = vsel %vm79, %v265, 0.0
    %267 = vadd.xlane.f32.xlu0 %v266
    %v268 = vpop.xlane.xlu0 %267
    %v269 = vmax.f32 %v268, 1e-16
    %v270 = vrsqrt.pop %v269
    %v271 = vmul.f32 %v270, 3.535534
    %v272 = vmul.f32 %v262, %v271
    %v274 = vsel %vm79, %v272, 0
    %276 = vmatprep.subr.mxu0 0.0
    %277 = vmatpush1.xpose.msra.mxu0 0.0
    %278 = vmatprep.subr.mxu0 0.0
    %279 = vmatpush1.xpose.msra.mxu0 0.0
    %280 = vmatprep.subr.mxu0 0.0
    %281 = vmatpush1.xpose.msra.mxu0 0.0
    %282 = vmatprep.subr.mxu0 0.0
    %283 = vmatpush1.xpose.msra.mxu0 0.0
    %284 = vmatprep.subr.mxu0 0.0
    %285 = vmatpush1.xpose.msra.mxu0 0.0
    %286 = vmatprep.subr.mxu0 0.0
    %287 = vmatpush1.xpose.msra.mxu0 0.0
    %288 = vmatprep.subr.mxu0 0.0
    %289 = vmatpush1.xpose.msra.mxu0 0.0
    %290 = vmatprep.subr.mxu0 0.0
    %291 = vmatpush1.xpose.msra.mxu0 0.0
    %292 = vmatprep.subr.mxu0 0.0
    %293 = vmatpush1.xpose.msra.mxu0 0.0
    %294 = vmatprep.subr.mxu0 0.0
    %295 = vmatpush1.xpose.msra.mxu0 0.0
    %296 = vmatprep.subr.mxu0 0.0
    %297 = vmatpush1.xpose.msra.mxu0 0.0
    %298 = vmatprep.subr.mxu0 0.0
    %299 = vmatpush1.xpose.msra.mxu0 0.0
    %300 = vmatprep.subr.mxu0 0.0
    %301 = vmatpush1.xpose.msra.mxu0 0.0
    %302 = vmatprep.subr.mxu0 0.0
    %303 = vmatpush1.xpose.msra.mxu0 0.0
    %304 = vmatprep.subr.mxu0 0.0
    %305 = vmatpush1.xpose.msra.mxu0 0.0
    %306 = vmatprep.subr.mxu0 0.0
    %307 = vmatpush1.xpose.msra.mxu0 %v274
    %308 = vmatprep.subr.mxu0 0.0
    %309 = vmatpush2.xpose.msra.mxu0 0.0
    %310 = vmatprep.subr.mxu0 0.0
    %311 = vmatpush2.xpose.msra.mxu0 0.0
    %312 = vmatprep.subr.mxu0 0.0
    %313 = vmatpush2.xpose.msra.mxu0 0.0
    %314 = vmatprep.subr.mxu0 0.0
    %315 = vmatpush2.xpose.msra.mxu0 0.0
    %316 = vmatprep.subr.mxu0 0.0
    %317 = vmatpush2.xpose.msra.mxu0 0.0
    %318 = vmatprep.subr.mxu0 0.0
    %319 = vmatpush2.xpose.msra.mxu0 0.0
    %320 = vmatprep.subr.mxu0 0.0
    %321 = vmatpush2.xpose.msra.mxu0 0.0
    %322 = vmatprep.subr.mxu0 0.0
    %323 = vmatpush2.xpose.msra.mxu0 0.0
    %324 = vmatprep.subr.mxu0 0.0
    %325 = vmatpush2.xpose.msra.mxu0 0.0
    %326 = vmatprep.subr.mxu0 0.0
    %327 = vmatpush2.xpose.msra.mxu0 0.0
    %328 = vmatprep.subr.mxu0 0.0
    %329 = vmatpush2.xpose.msra.mxu0 0.0
    %330 = vmatprep.subr.mxu0 0.0
    %331 = vmatpush2.xpose.msra.mxu0 0.0
    %332 = vmatprep.subr.mxu0 0.0
    %333 = vmatpush2.xpose.msra.mxu0 0.0
    %334 = vmatprep.subr.mxu0 0.0
    %335 = vmatpush2.xpose.msra.mxu0 0.0
    %336 = vmatprep.subr.mxu0 0.0
    %337 = vmatpush2.xpose.msra.mxu0 0.0
    %338 = vmatprep.subr.mxu0 0.0
    %339 = vmatpush2.xpose.msra.mxu0 0.0
    %340 = vmatprep.mubr.f32.mxu0 0.0
    %341 = vmatmul.mubr.f32.gmra.mxu0 %v274
    %v342 = vpop.f32.mrf.mxu0
    %v343 = vadd.f32 0.0, %v342
    %v344 = vpop.f32.mrf.mxu0
    %345 = vdwg.mxu0
    %v346 = vmul.f32 %v343, 1.442695
    %v347 = vpow.pop %v346
    %v348 = vsel %vm76, %v347, 0.0
    %v349 = vsel %vm163, %v348, 0.0
    %350 = vadd.xlane.f32.xlu0 %v349
    %v351 = vpop.xlane.xlu0 %350
    %v352 = vadd.f32 %v347, %v351
    %v353 = vlog2.pop %v352
    %v354 = vmul.f32 %v353, 0.6931472
    %v355 = vsub.f32 %v354, %v343
    %v356 = vmul.f32 %v69, %v355
    %v357 = vsel %vm163, %v356, 0.0
    %358 = vadd.xlane.f32.xlu0 %v357
    %v359 = vpop.xlane.xlu0 %358
    %v360 = vrot.slane %v359, 4
    %v361 = vadd.f32 %v359, %v360
    %v362 = vrot.slane %v361, 2
    %v363 = vadd.f32 %v361, %v362
    %v364 = vrot.slane %v363, 1
    %v365 = vadd.f32 %v363, %v364
    %s366 = vtos %v365
    %s367 = smul.f32 %s366, 0.125
    %s368 = sadd.f32 %s182, %s367
    %s369 = smul.f32 %s368, 0.5
    %s370 = scalar_lea.smem [#allocation11], 0
    %371 = sst [smem:[%s370]] %s369
    // Predicated region
    $region38: #{tpu_custom_call.1} parent=1 // pred_check
      _
    $region39: #{tpu_custom_call.1} parent=1 // pred_check_branch
      %373 = sbr.rel (0) target = $region41
    $region40: #{tpu_custom_call.1} parent=1 // pred_region
      %s375 = ssub.s32 16, 16
      %376 = vsyncadd [#allocation5], %s375
      %379 = dma.smem_to_hbm [#allocation11], 16, %s5, [#allocation5]
    $region41: #{tpu_custom_call.1} parent=1 // pred_fallthru
      _
    // Predicated region
    $region42: #{tpu_custom_call.1} parent=1 // pred_check
      _
    $region43: #{tpu_custom_call.1} parent=1 // pred_check_branch
      %381 = sbr.rel (0) target = $region45
    $region44: #{tpu_custom_call.1} parent=1 // pred_region
      %382 = dma.done [#allocation5], 16
    $region45: #{tpu_custom_call.1} parent=1 // pred_fallthru
      _
    %383 = sfence
    %384 = vsyncpa [#allocation4], 1
    %385 = vsyncpa [#allocation7], 1
    %386 = vsyncpa [#allocation10], 1
    %387 = vsyncpa [#allocation5], 1

</llo_original>
